<compile_context>
chip_gen: v5e
topology: v5e:2x2
jax: 0.10.0
libtpu: 0.0.40
codegen_flags: <defaults>
</compile_context>

<pallas_src>
import functools

import jax
import jax.numpy as jnp
import numpy as np
from jax.experimental import pallas as pl
from jax.experimental.pallas import tpu as pltpu


# --------------------------------------------------------------------------
# Kernel 1: accumulate energy = X @ X^T over N tiles (into the resident
# output block), softmax at the last N step.
# --------------------------------------------------------------------------
def _attn_kernel(x_ref, attn_ref, *, c_real, c_rows, tcr, dot_dtype):
    n = pl.program_id(2)

    @pl.when(n == 0)
    def _init():
        attn_ref[...] = jnp.zeros_like(attn_ref)

    x_full = x_ref[...]                                    # (Bt, Cp, TN) f32
    if c_rows == 1:
        x_rows = x_full                                    # full-row Gram block
    else:
        # v7x megacore: this core only owns rows [cr*tcr, cr*tcr + tcr).
        cr = pl.program_id(1)
        start = pl.multiple_of(cr * tcr, 8)
        x_rows = x_ref[:, pl.ds(start, tcr), :]            # (Bt, TCr, TN)

    # energy[b, i, j] += sum_n x_rows[b, i, n] * x_full[b, j, n]
    # (contraction over the last dim of both operands -- no transpose
    #  materialized; bf16 operands, f32 accumulation.)
    attn_ref[...] += jax.lax.dot_general(
        x_rows.astype(dot_dtype), x_full.astype(dot_dtype),
        dimension_numbers=(((2,), (2,)), ((0,), (0,))),
        preferred_element_type=jnp.float32)

    @pl.when(n == pl.num_programs(2) - 1)
    def _finalize():
        energy = attn_ref[...]                             # (Bt, TCr, Cp) f32
        cp = energy.shape[-1]
        if cp != c_real:
            # Mask padded channel columns to +inf BEFORE the min so an
            # all-positive real row cannot pick up the spurious 0 from the
            # zero-padded columns (which would underflow every real exp and
            # produce a 0 denominator -> Inf/NaN).  exp(m - inf) == 0, so the
            # padded columns also drop out of the normalization for free.
            col = jax.lax.broadcasted_iota(jnp.int32, energy.shape, 2)
            energy = jnp.where(col < c_real, energy, jnp.inf)
        # softmax(rowmax - energy) == softmax(-energy); stabilize with the
        # row MIN (single row-reduce, mathematically identical).
        m = jnp.min(energy, axis=-1, keepdims=True)
        p = jnp.exp(m - energy)
        denom = jnp.sum(p, axis=-1, keepdims=True)
        attn_ref[...] = p * pl.reciprocal(denom, approx=False)


# --------------------------------------------------------------------------
# Kernel 2: out = gamma * (attention @ X) + X, tiled over N.
# --------------------------------------------------------------------------
def _out_kernel(gamma_ref, attn_ref, x_ref, o_ref, *, dot_dtype):
    x = x_ref[...]                                         # (Bt, Cp, TN) f32
    out = jax.lax.dot_general(
        attn_ref[...].astype(dot_dtype), x.astype(dot_dtype),
        dimension_numbers=(((2,), (1,)), ((0,), (0,))),
        preferred_element_type=jnp.float32)
    gamma = gamma_ref[0, 0]
    # Residual add stays in f32 on the un-rounded x (gamma==0 -> out == x).
    o_ref[...] = (gamma * out + x).astype(o_ref.dtype)


# --------------------------------------------------------------------------
# Host-side wrapper
# --------------------------------------------------------------------------
def _round_up(v, m):
    return (v + m - 1) // m * m


def ca_forward(x, gamma, *, tn_cap=1024, matmul_dtype=jnp.bfloat16,
               vmem_budget_bytes=20 << 20):
    """x: (B, C, H, W) float32, gamma: scalar-like. Returns (B, C, H, W).

    matmul_dtype: MXU operand dtype (default bf16, f32 accumulation).  Use
    jnp.float32 for bit-faithful full-precision semantics.
    """
    B, C, H, W = x.shape
    N = H * W

    Cp = _round_up(C, 8)                       # f32 sublane multiple
    TN = min(_round_up(tn_cap, 128), _round_up(N, 128))   # lane-dense N tile
    Np = _round_up(N, TN)

    # Conservative per-batch-element per-step VMEM footprint (double-buffered
    # f32 blocks, both passes).  Batch tile no longer needs to divide B: pad.
    per_elem = 16 * Cp * (TN + Cp)
    Bt = max(1, min(B, vmem_budget_bytes // per_elem))
    Bp = _round_up(B, Bt)
    b_tiles = Bp // Bt
    n_tiles = Np // TN

    # v7x megacore: give pass 1 a second parallel axis (Gram-row tiles) when
    # the batch axis alone cannot feed two TensorCores.  No effect on v5e/v6e.
    if b_tiles == 1 and Cp >= 256 and (Cp // 2) % 8 == 0:
        c_rows = 2
    else:
        c_rows = 1
    TCr = Cp // c_rows

    x_flat = x.reshape(B, C, N)
    if (Bp, Cp, Np) != (B, C, N):
        x_flat = jnp.pad(x_flat, ((0, Bp - B), (0, Cp - C), (0, Np - N)))
    gamma_arr = jnp.asarray(gamma, dtype=jnp.float32).reshape(1, 1)

    # Explicit scoped-VMEM limit so bigger TN isn't capped by the per-chip
    # default (16 MiB v5e / 32 MiB v6e,v7x); stays well under 64 MiB physical.
    vmem_limit = int(min(40 << 20, max(16 << 20, 2 * Bt * per_elem)))

    # ---- Pass 1: attention = softmax(rowmax(XX^T) - XX^T) per batch ----
    attn = pl.pallas_call(
        functools.partial(_attn_kernel, c_real=C, c_rows=c_rows, tcr=TCr,
                          dot_dtype=matmul_dtype),
        out_shape=jax.ShapeDtypeStruct((Bp, Cp, Cp), jnp.float32),
        grid_spec=pltpu.PrefetchScalarGridSpec(
            num_scalar_prefetch=0,
            grid=(b_tiles, c_rows, n_tiles),
            in_specs=[pl.BlockSpec((Bt, Cp, TN), lambda b, cr, n: (b, 0, n))],
            # Block index constant over n => VMEM-resident f32 accumulator.
            out_specs=pl.BlockSpec((Bt, TCr, Cp), lambda b, cr, n: (b, cr, 0)),
        ),
        compiler_params=pltpu.CompilerParams(
            dimension_semantics=("parallel", "parallel", "arbitrary"),
            vmem_limit_bytes=vmem_limit),
    )(x_flat)

    # ---- Pass 2: out = gamma * (attention @ X) + X, fully parallel grid ----
    # NOTE: the attention block index is constant over the inner n axis, so
    # the pipeline does not re-fetch it between n steps.
    out_flat = pl.pallas_call(
        functools.partial(_out_kernel, dot_dtype=matmul_dtype),
        out_shape=jax.ShapeDtypeStruct((Bp, Cp, Np), x.dtype),
        grid_spec=pl.GridSpec(
            grid=(b_tiles, n_tiles),
            in_specs=[
                pl.BlockSpec(memory_space=pltpu.SMEM),                # gamma (1,1)
                pl.BlockSpec((Bt, Cp, Cp), lambda b, n: (b, 0, 0)),   # attention
                pl.BlockSpec((Bt, Cp, TN), lambda b, n: (b, 0, n)),   # x chunk
            ],
            out_specs=pl.BlockSpec((Bt, Cp, TN), lambda b, n: (b, 0, n)),
        ),
        compiler_params=pltpu.CompilerParams(
            dimension_semantics=("parallel", "parallel"),
            vmem_limit_bytes=vmem_limit),
    )(gamma_arr, attn, x_flat)

    return out_flat[:B, :C, :N].reshape(B, C, H, W)


def ca_reference(x, gamma):
    """Pure-JAX reference mirroring the PyTorch forward."""
    B, C, H, W = x.shape
    q = x.reshape(B, C, -1)
    k = jnp.transpose(q, (0, 2, 1))
    energy = jnp.einsum("bcn,bnd->bcd", q, k)
    energy_new = jnp.max(energy, axis=-1, keepdims=True) - energy
    attention = jax.nn.softmax(energy_new, axis=-1)
    out = jnp.einsum("bcd,bdn->bcn", attention, q)
    out = out.reshape(B, C, H, W)
    return gamma * out + x


if __name__ == "__main__":
    key = jax.random.PRNGKey(0)

    # Parameter per __init__: gamma has shape (1,), initialized to 0 in
    # PyTorch.  Use a nonzero value so the attention path is exercised.
    gamma = jnp.full((1,), 0.5, dtype=jnp.float32)

    B, C, H, W = 2, 4, 16, 16
    x = jax.random.normal(key, (B, C, H, W), dtype=jnp.float32)
    ref = ca_reference(x, float(gamma[0]))

    # 1) Default path (bf16 MXU operands, f32 accumulation + f32 residual).
    out_bf16 = jax.block_until_ready(ca_forward(x, gamma))
    np.testing.assert_allclose(np.asarray(out_bf16), np.asarray(ref),
                               rtol=2e-2, atol=2e-2)

    # 2) Full-f32 path matches the reference tightly.
    out_f32 = jax.block_until_ready(
        ca_forward(x, gamma, matmul_dtype=jnp.float32))
    np.testing.assert_allclose(np.asarray(out_f32), np.asarray(ref),
                               rtol=1e-5, atol=1e-5)

    # 3) gamma == 0 (the PyTorch init value): output equals the input exactly,
    #    even on the bf16 path, because the residual add stays in f32.
    gamma0 = jnp.zeros((1,), dtype=jnp.float32)
    out_id = jax.block_until_ready(ca_forward(x, gamma0))
    np.testing.assert_array_equal(np.asarray(out_id), np.asarray(x))

    # 4) 7x7 spatial exercises the C->8 / N->128 padding + column-mask path.
    x2 = jax.random.normal(jax.random.PRNGKey(1), (2, 4, 7, 7), dtype=jnp.float32)
    out2 = jax.block_until_ready(ca_forward(x2, gamma, matmul_dtype=jnp.float32))
    ref2 = ca_reference(x2, float(gamma[0]))
    np.testing.assert_allclose(np.asarray(out2), np.asarray(ref2),
                               rtol=1e-5, atol=1e-5)

    # 5) Shifted input -> every real Gram entry is large and positive: this is
    #    the configuration where the old min-stabilizer picked up the padded
    #    zero columns and produced Inf/NaN.  The fixed kernel stays finite and
    #    accurate (softer attention => slightly relaxed tolerance).
    x3 = x2 + 2.5
    out3 = jax.block_until_ready(ca_forward(x3, gamma, matmul_dtype=jnp.float32))
    ref3 = ca_reference(x3, float(gamma[0]))
    assert np.all(np.isfinite(np.asarray(out3)))
    np.testing.assert_allclose(np.asarray(out3), np.asarray(ref3),
                               rtol=1e-3, atol=1e-3)

    print("KERNEL_OK")
</pallas_src>

<mosaic_0001>
module attributes {stable_mosaic.version = 11 : i64} {
  func.func @_attn_kernel(%arg0: i32, %arg1: i32, %arg2: i32, %arg3: memref<2x8x256xf32, #tpu.memory_space<vmem>>, %arg4: memref<2x8x8xf32, #tpu.memory_space<vmem>>) attributes {dimension_semantics = [#tpu.dimension_semantics<parallel>, #tpu.dimension_semantics<parallel>, #tpu.dimension_semantics<arbitrary>], iteration_bounds = array<i64: 1, 1, 1>, scalar_prefetch = 0 : i64, scratch_operands = 0 : i64, tpu.core_type = #tpu.core_type<tc>, window_params = [{transform_indices = @transform_0, window_bounds = array<i64: 2, 8, 256>}, {transform_indices = @transform_1, window_bounds = array<i64: 2, 8, 8>}]} {
    %c0_i32 = arith.constant 0 : i32
    %0 = arith.cmpi eq, %arg2, %c0_i32 : i32
    %1 = arith.extui %0 : i1 to i32
    %c0_i32_0 = arith.constant 0 : i32
    %2 = arith.cmpi ne, %1, %c0_i32_0 : i32
    scf.if %2 {
      %cst_11 = arith.constant 0.000000e+00 : f32
      %13 = vector.broadcast %cst_11 : f32 to vector<2x8x8xf32>
      %c0_12 = arith.constant 0 : index
      %c0_13 = arith.constant 0 : index
      %c0_14 = arith.constant 0 : index
      %14 = vector.load %arg4[%c0_12, %c0_13, %c0_14] : memref<2x8x8xf32, #tpu.memory_space<vmem>>, vector<2x8x8xf32>
      tpu.vector_store %arg4[%c0_12, %c0_13, %c0_14], %13 {strides = array<i32>} : memref<2x8x8xf32, #tpu.memory_space<vmem>>, vector<2x8x8xf32>,
    } else {
    }
    %c0 = arith.constant 0 : index
    %c0_1 = arith.constant 0 : index
    %c0_2 = arith.constant 0 : index
    %3 = vector.load %arg3[%c0, %c0_1, %c0_2] : memref<2x8x256xf32, #tpu.memory_space<vmem>>, vector<2x8x256xf32>
    %c0_3 = arith.constant 0 : index
    %c0_4 = arith.constant 0 : index
    %c0_5 = arith.constant 0 : index
    %4 = vector.load %arg4[%c0_3, %c0_4, %c0_5] : memref<2x8x8xf32, #tpu.memory_space<vmem>>, vector<2x8x8xf32>
    %5 = arith.truncf %3 : vector<2x8x256xf32> to vector<2x8x256xbf16>
    %6 = arith.truncf %3 : vector<2x8x256xf32> to vector<2x8x256xbf16>
    %cst = arith.constant dense<0.000000e+00> : vector<2x8x8xf32>
    %7 = tpu.matmul %5, %6, %cst {dimension_numbers = #tpu.dot_dimension_numbers<[2], [2], [1], [1], [0, 0, 0, 1, 1, 1], [0], [0]>} : vector<2x8x256xbf16>, vector<2x8x256xbf16>, vector<2x8x8xf32> -> vector<2x8x8xf32>
    %8 = arith.addf %4, %7 : vector<2x8x8xf32>
    %c0_6 = arith.constant 0 : index
    %c0_7 = arith.constant 0 : index
    %c0_8 = arith.constant 0 : index
    %9 = vector.load %arg4[%c0_6, %c0_7, %c0_8] : memref<2x8x8xf32, #tpu.memory_space<vmem>>, vector<2x8x8xf32>
    tpu.vector_store %arg4[%c0_6, %c0_7, %c0_8], %8 {strides = array<i32>} : memref<2x8x8xf32, #tpu.memory_space<vmem>>, vector<2x8x8xf32>,
    %c0_i32_9 = arith.constant 0 : i32
    %10 = arith.cmpi eq, %arg2, %c0_i32_9 : i32
    %11 = arith.extui %10 : i1 to i32
    %c0_i32_10 = arith.constant 0 : i32
    %12 = arith.cmpi ne, %11, %c0_i32_10 : i32
    scf.if %12 {
      %c0_11 = arith.constant 0 : index
      %c0_12 = arith.constant 0 : index
      %c0_13 = arith.constant 0 : index
      %13 = vector.load %arg4[%c0_11, %c0_12, %c0_13] : memref<2x8x8xf32, #tpu.memory_space<vmem>>, vector<2x8x8xf32>
      %14 = tpu.iota {dimensions = array<i32: 2>} : vector<2x8x8xi32>
      %c4_i32 = arith.constant 4 : i32
      %15 = vector.broadcast %c4_i32 : i32 to vector<2x8x8xi32>
      %16 = arith.cmpi slt, %14, %15 : vector<2x8x8xi32>
      %cst_14 = arith.constant 0x7F800000 : f32
      %17 = vector.broadcast %cst_14 : f32 to vector<2x8x8xf32>
      %18 = arith.select %16, %13, %17 : vector<2x8x8xi1>, vector<2x8x8xf32>
      %cst_15 = arith.constant dense<0x7F800000> : vector<2x8xf32>
      %19 = vector.multi_reduction <minimumf>, %18, %cst_15 [2] : vector<2x8x8xf32> to vector<2x8xf32>
      %20 = vector.shape_cast %19 : vector<2x8xf32> to vector<2x8x1xf32>
      %21 = vector.broadcast %20 : vector<2x8x1xf32> to vector<2x8x8xf32>
      %22 = arith.subf %21, %18 : vector<2x8x8xf32>
      %23 = math.exp %22 : vector<2x8x8xf32>
      %cst_16 = arith.constant dense<0.000000e+00> : vector<2x8xf32>
      %24 = vector.multi_reduction <add>, %23, %cst_16 [2] : vector<2x8x8xf32> to vector<2x8xf32>
      %25 = vector.shape_cast %24 : vector<2x8xf32> to vector<2x8x1xf32>
      %26 = tpu.reciprocal %25 : vector<2x8x1xf32> -> vector<2x8x1xf32>
      %27 = vector.broadcast %26 : vector<2x8x1xf32> to vector<2x8x8xf32>
      %28 = arith.mulf %23, %27 : vector<2x8x8xf32>
      %c0_17 = arith.constant 0 : index
      %c0_18 = arith.constant 0 : index
      %c0_19 = arith.constant 0 : index
      %29 = vector.load %arg4[%c0_17, %c0_18, %c0_19] : memref<2x8x8xf32, #tpu.memory_space<vmem>>, vector<2x8x8xf32>
      tpu.vector_store %arg4[%c0_17, %c0_18, %c0_19], %28 {strides = array<i32>} : memref<2x8x8xf32, #tpu.memory_space<vmem>>, vector<2x8x8xf32>,
    } else {
    }
    return
  }
  func.func @transform_0(%arg0: i32, %arg1: i32, %arg2: i32) -> (i32, i32, i32) {
    %c0_i32 = arith.constant 0 : i32
    %c0_i32_0 = arith.constant 0 : i32
    return %arg0, %c0_i32, %arg2 : i32, i32, i32
  }
  func.func @transform_1(%arg0: i32, %arg1: i32, %arg2: i32) -> (i32, i32, i32) {
    %c0_i32 = arith.constant 0 : i32
    %c0_i32_0 = arith.constant 0 : i32
    return %arg0, %arg1, %c0_i32 : i32, i32, i32
  }
}

</mosaic_0001>

<llo_original>
// kernel: tpu_custom_call.1
$region0: #{tpu_custom_call.1}
  #allocation0 [shape = 'u32[]', space=smem, size = 0x4, offset = 0x4, fixed_abs, tag = 'smem constant byte address 0x4 - core index']
  #allocation1 [shape = 'u32[72,128]{1,0:T(1,128)}', space=vmem, size = 0x9000, scoped, tag = 'internal scratch']
  %s0 = inlined_call_operand.hbm [shape: f32[2,8,256], index: 0, kind: input, shape index: {}]
  %s1 = inlined_call_operand.hbm [shape: f32[2,8,8], index: 1, kind: output, shape index: {}]
  %s2 = sld [smem:[#allocation0]]
  $region26: #{tpu_custom_call.1} parent=0
    _
  %s4 = ssub.s32 1, %s2
  %s5 = scalar_select 0, %s4, %s2
  $region1: #{tpu_custom_call.1} parent=0
    #allocation2 [shape = 'u8[16384]{0}', space=vmem, size = 0x4000, scoped, tag = 'input window, operand 0, single buffered']
    #allocation3 [shape = 's32[1]{0}', space=sflag, size = 0x4, scoped, tag = 'scoped memory for tpu_custom_call.1']
    #allocation4 [shape = 's32[1]{0}', space=sflag, size = 0x4, scoped, tag = 'scoped memory for tpu_custom_call.1']
    #allocation5 [shape = 'u8[8192]{0}', space=vmem, size = 0x2000, scoped, tag = 'output window, operand 0, single buffered']
    %6 = vsyncpa [#allocation3], 0
    %7 = vsyncpa [#allocation4], 0
    // Predicated region
    $region2: #{tpu_custom_call.1} parent=1 // pred_check
      _
    $region3: #{tpu_custom_call.1} parent=1 // pred_check_branch
      %9 = sbr.rel (0) target = $region5
    $region4: #{tpu_custom_call.1} parent=1 // pred_region
      %11 = vsyncadd [#allocation3], 0
      %s12 = sshll.u32 %s0, 4
      %s13 = int_to_ptr.hbm [resolvable:$true] %s12
      %s14 = sshll.u32 [#allocation2], 4
      %s15 = int_to_ptr.vmem [resolvable:$true] %s14
      %20 = dma.hbm_to_vmem [thread:$0]  %s13, 512, %s15, [#allocation3], 256, 256, 16
    $region5: #{tpu_custom_call.1} parent=1 // pred_fallthru
      _
    // Predicated region
    $region6: #{tpu_custom_call.1} parent=1 // pred_check
      _
    $region7: #{tpu_custom_call.1} parent=1 // pred_check_branch
      %22 = sbr.rel (0) target = $region9
    $region8: #{tpu_custom_call.1} parent=1 // pred_region
      %24 = dma.done [#allocation3], 512
    $region9: #{tpu_custom_call.1} parent=1 // pred_fallthru
      _
    %p26 = scmp.eq.s32.totalorder 0, 0
    // Predicated region
    $region10: #{tpu_custom_call.1} parent=1 // pred_check
      %p27 = pneg %p26
    $region11: #{tpu_custom_call.1} parent=1 // pred_check_branch
      %29 = sbr.rel (%p27) target = $region13
    $region12: #{tpu_custom_call.1} parent=1 // pred_region
      %vm30 = vcmask 64512
      %31 = vst.msk [vmem:[#allocation5] sm:$0xff] %vm30, 0.0
      %32 = vst.msk [vmem:[#allocation5 + $0x8] sm:$0xff] %vm30, 0.0
    $region13: #{tpu_custom_call.1} parent=1 // pred_fallthru
      _
    %v33 = vld [vmem:[#allocation2] sm:$0xff]
    %v34 = vld [vmem:[#allocation2 + $0x8] sm:$0xff]
    %v35 = vld [vmem:[#allocation2 + $0x10] sm:$0xff]
    %v36 = vld [vmem:[#allocation2 + $0x18] sm:$0xff]
    %v37 = vld [vmem:[#allocation5] sm:$0xff]
    %v38 = vld [vmem:[#allocation5 + $0x8] sm:$0xff]
    %v39 = vpack.c.bf16 %v34, %v33
    %v40 = vpack.c.bf16 %v36, %v35
    %v42 = vunpack.c.l.b16 %v39
    %v43 = vunpack.c.h.b16 %v39
    %v44 = vpack.c.b16 %v42, %v42
    %v45 = vpack.c.b16 %v43, %v43
    %48 = vmatpush.bf16.xpose.msra.mxu0 0
    %49 = vmatpush.bf16.xpose.msra.mxu0 0
    %50 = vmatpush.bf16.xpose.msra.mxu0 0
    %51 = vmatpush.bf16.xpose.msra.mxu0 0
    %52 = vmatpush.bf16.xpose.msra.mxu0 0
    %53 = vmatpush.bf16.xpose.msra.mxu0 0
    %54 = vmatpush.bf16.xpose.msra.mxu0 0
    %55 = vmatpush.bf16.xpose.msra.mxu0 %v44
    %56 = vmatmul.bf16.gmra.mxu0 %v44
    %v57 = vpop.f32.mrf.mxu0
    %v58 = vadd.f32 0.0, %v57
    %v59 = vpop.f32.mrf.mxu0
    %60 = vdwg.mxu0
    %61 = vmatpush.bf16.xpose.msra.mxu0 0
    %62 = vmatpush.bf16.xpose.msra.mxu0 0
    %63 = vmatpush.bf16.xpose.msra.mxu0 0
    %64 = vmatpush.bf16.xpose.msra.mxu0 0
    %65 = vmatpush.bf16.xpose.msra.mxu0 0
    %66 = vmatpush.bf16.xpose.msra.mxu0 0
    %67 = vmatpush.bf16.xpose.msra.mxu0 0
    %68 = vmatpush.bf16.xpose.msra.mxu0 %v45
    %69 = vmatmul.bf16.gmra.mxu0 %v45
    %v70 = vpop.f32.mrf.mxu0
    %v71 = vadd.f32 %v58, %v70
    %v72 = vpop.f32.mrf.mxu0
    %73 = vdwg.mxu0
    %v75 = vunpack.c.l.b16 %v40
    %v76 = vunpack.c.h.b16 %v40
    %v77 = vpack.c.b16 %v75, %v75
    %v78 = vpack.c.b16 %v76, %v76
    %81 = vmatpush.bf16.xpose.msra.mxu0 0
    %82 = vmatpush.bf16.xpose.msra.mxu0 0
    %83 = vmatpush.bf16.xpose.msra.mxu0 0
    %84 = vmatpush.bf16.xpose.msra.mxu0 0
    %85 = vmatpush.bf16.xpose.msra.mxu0 0
    %86 = vmatpush.bf16.xpose.msra.mxu0 0
    %87 = vmatpush.bf16.xpose.msra.mxu0 0
    %88 = vmatpush.bf16.xpose.msra.mxu0 %v77
    %89 = vmatmul.bf16.gmra.mxu0 %v77
    %v90 = vpop.f32.mrf.mxu0
    %v91 = vadd.f32 0.0, %v90
    %v92 = vpop.f32.mrf.mxu0
    %93 = vdwg.mxu0
    %94 = vmatpush.bf16.xpose.msra.mxu0 0
    %95 = vmatpush.bf16.xpose.msra.mxu0 0
    %96 = vmatpush.bf16.xpose.msra.mxu0 0
    %97 = vmatpush.bf16.xpose.msra.mxu0 0
    %98 = vmatpush.bf16.xpose.msra.mxu0 0
    %99 = vmatpush.bf16.xpose.msra.mxu0 0
    %100 = vmatpush.bf16.xpose.msra.mxu0 0
    %101 = vmatpush.bf16.xpose.msra.mxu0 %v78
    %102 = vmatmul.bf16.gmra.mxu0 %v78
    %v103 = vpop.f32.mrf.mxu0
    %v104 = vadd.f32 %v91, %v103
    %v105 = vpop.f32.mrf.mxu0
    %106 = vdwg.mxu0
    %v107 = vadd.f32 %v37, %v71
    %v108 = vadd.f32 %v38, %v104
    %vm109 = vcmask 64512
    %110 = vst.msk [vmem:[#allocation5] sm:$0xff] %vm109, %v107
    %111 = vst.msk [vmem:[#allocation5 + $0x8] sm:$0xff] %vm109, %v108
    // Predicated region
    $region14: #{tpu_custom_call.1} parent=1 // pred_check
      %p112 = pneg %p26
    $region15: #{tpu_custom_call.1} parent=1 // pred_check_branch
      %114 = sbr.rel (%p112) target = $region17
    $region16: #{tpu_custom_call.1} parent=1 // pred_region
      %v115 = vld [vmem:[#allocation5] sm:$0xff]
      %v116 = vld [vmem:[#allocation5 + $0x8] sm:$0xff]
      %v117 = vlaneseq
      %v118 = vand.u32 %v117, 127
      %vm119 = vcmp.lt.s32.totalorder %v118, 4
      %v120 = vsel %vm119, %v115, inf
      %v121 = vsel %vm119, %v116, inf
      %v122 = vsel %vm109, %v120, inf
      %123 = vmin.xlane.f32.xlu0 %v122
      %v124 = vpop.xlane.xlu0 %123
      %v125 = vsel %vm109, %v121, inf
      %126 = vmin.xlane.f32.xlu0 %v125
      %v127 = vpop.xlane.xlu0 %126
      %v128 = vsub.f32 %v124, %v120
      %v129 = vsub.f32 %v127, %v121
      %v130 = vmul.f32 %v128, 1.442695
      %v131 = vpow.pop %v130
      %v132 = vmul.f32 %v129, 1.442695
      %v133 = vpow.pop %v132
      %v134 = vsel %vm109, %v131, 0.0
      %135 = vadd.xlane.f32.xlu0 %v134
      %v136 = vpop.xlane.xlu0 %135
      %v137 = vsel %vm109, %v133, 0.0
      %138 = vadd.xlane.f32.xlu0 %v137
      %v139 = vpop.xlane.xlu0 %138
      %v140 = vrcp.pop %v136
      %v141 = vmul.f32 %v136, %v140
      %v142 = vsub.f32 1.0, %v141
      %v143 = vmul.f32 %v140, %v142
      %v144 = vadd.f32 %v140, %v143
      %vm145 = vweird.f32 %v136
      %vm146 = vweird.f32 %v140
      %vm147 = vmor %vm145, %vm146
      %v148 = vsel %vm147, %v140, %v144
      %v149 = vand.u32 2147483647, %v136
      %vm150 = vcmp.eq.f32.partialorder %v149, 8.507059e+37
      %v151 = vand.u32 %v136, 2147483648
      %v152 = vor.u32 1.1754944e-38, %v151
      %v153 = vsel %vm150, %v152, %v148
      %v154 = vrcp.pop %v139
      %v155 = vmul.f32 %v139, %v154
      %v156 = vsub.f32 1.0, %v155
      %v157 = vmul.f32 %v154, %v156
      %v158 = vadd.f32 %v154, %v157
      %vm159 = vweird.f32 %v139
      %vm160 = vweird.f32 %v154
      %vm161 = vmor %vm159, %vm160
      %v162 = vsel %vm161, %v154, %v158
      %v163 = vand.u32 2147483647, %v139
      %vm164 = vcmp.eq.f32.partialorder %v163, 8.507059e+37
      %v165 = vand.u32 %v139, 2147483648
      %v166 = vor.u32 1.1754944e-38, %v165
      %v167 = vsel %vm164, %v166, %v162
      %v168 = vmul.f32 %v131, %v153
      %v169 = vmul.f32 %v133, %v167
      %170 = vst.msk [vmem:[#allocation5] sm:$0xff] %vm109, %v168
      %171 = vst.msk [vmem:[#allocation5 + $0x8] sm:$0xff] %vm109, %v169
    $region17: #{tpu_custom_call.1} parent=1 // pred_fallthru
      _
    // Predicated region
    $region18: #{tpu_custom_call.1} parent=1 // pred_check
      _
    $region19: #{tpu_custom_call.1} parent=1 // pred_check_branch
      %173 = sbr.rel (0) target = $region21
    $region20: #{tpu_custom_call.1} parent=1 // pred_region
      %175 = vsyncadd [#allocation4], 0
      %s176 = sshll.u32 [#allocation5], 4
      %s177 = int_to_ptr.vmem [resolvable:$true] %s176
      %s178 = sshll.u32 %s1, 4
      %s179 = int_to_ptr.hbm [resolvable:$true] %s178
      %184 = dma.vmem_to_hbm [thread:$0]  %s177, 256, %s179, [#allocation4], 128, 128, 8
    $region21: #{tpu_custom_call.1} parent=1 // pred_fallthru
      _
    // Predicated region
    $region22: #{tpu_custom_call.1} parent=1 // pred_check
      _
    $region23: #{tpu_custom_call.1} parent=1 // pred_check_branch
      %186 = sbr.rel (0) target = $region25
    $region24: #{tpu_custom_call.1} parent=1 // pred_region
      %188 = dma.done [#allocation4], 256
    $region25: #{tpu_custom_call.1} parent=1 // pred_fallthru
      _
    %189 = vsyncpa [#allocation3], 1
    %190 = vsyncpa [#allocation4], 1

</llo_original>
